<compile_context>
chip_gen: v6e
topology: v6e:2x2x1
jax: 0.10.0
libtpu: 0.0.40
codegen_flags: <defaults>
</compile_context>

<pallas_src>
import functools

import jax
import jax.numpy as jnp
from jax.experimental import pallas as pl
from jax.experimental.pallas import tpu as pltpu


def _fused_pool_conv_hswish_kernel(x_ref, w_ref, b_ref, o_ref, *, W, use_mxu):
    # x_ref: (Cin, HW)      one image, flat spatial, NO padding
    # w_ref: (Cout_blk, Cin)
    # b_ref: (Cout_blk, 1)
    # o_ref: (Cout_blk, HW)
    Cin, HW = x_ref.shape

    x = x_ref[...]

    # flat-position iota -> edge masks (no integer division needed)
    pos = jax.lax.broadcasted_iota(jnp.int32, (1, HW), 1)
    col = pos % W
    not_left = col > 0                 # left tap exists
    not_right = col < (W - 1)          # right tap exists
    not_top = pos >= W                 # row > 0
    not_bot = pos < (HW - W)           # row < H-1

    # --- horizontal 3-tap (separable box filter, pass 1) --------------------
    # shifts on the XLU via pltpu.roll; circular wrap is masked off.
    left = jnp.where(not_left, pltpu.roll(x, 1, 1), 0.0)
    right = jnp.where(not_right, pltpu.roll(x, HW - 1, 1), 0.0)
    hsum = left + x + right            # (Cin, HW)

    # --- vertical 3-tap (pass 2), divide by 9 (count_include_pad=True) ------
    up = jnp.where(not_top, pltpu.roll(hsum, W, 1), 0.0)
    down = jnp.where(not_bot, pltpu.roll(hsum, HW - W, 1), 0.0)
    pool = (up + hsum + down) * (1.0 / 9.0)   # (Cin, HW)

    # --- 1x1 conv + bias -----------------------------------------------------
    w = w_ref[...]                      # (Cout_blk, Cin)
    if use_mxu:
        # large-HW regime: K=3 matmul on the MXU keeps VALU free for the pool
        t2 = b_ref[...] + jnp.dot(w, pool, preferred_element_type=jnp.float32)
    else:
        # tiny-HW regime: Cin (=3) broadcast FMAs on the VPU
        t2 = b_ref[...] + w[:, 0:1] * pool[0:1, :]
        for c in range(1, Cin):         # Cin is static, unrolls
            t2 = t2 + w[:, c:c + 1] * pool[c:c + 1, :]

    # --- epilogue: t2 * clamp(t2 + 3, 0, 6) / 6 ------------------------------
    gate = jnp.clip(t2 + 3.0, 0.0, 6.0)
    o_ref[...] = t2 * gate * (1.0 / 6.0)


def _pick_co_block(cout, hw, itemsize=4, max_block_bytes=3 << 20):
    # Largest multiple-of-8 divisor of Cout that (a) gives >= 2 Cout blocks so
    # a v7x chip can shard the axis across both TensorCores, and (b) keeps the
    # (co_blk, HW) output block small enough that double-buffering fits the
    # scoped VMEM budget on every generation (v5e 16 MiB default included).
    best = 8
    for cb in range(8, max(cout // 2, 8) + 1, 8):
        if cout % cb == 0 and cb * hw * itemsize <= max_block_bytes:
            best = cb
    return best


@jax.jit
def model_forward(x_nchw, conv_w, conv_b):
    # x_nchw: (N, Cin, H, W); conv_w: (Cout, Cin) (squeezed 1x1 conv weight);
    # conv_b: (Cout,)
    N, Cin, H, W = x_nchw.shape
    Cout = conv_w.shape[0]
    HW = H * W

    co_blk = _pick_co_block(Cout, HW)
    n_co = Cout // co_blk

    x_flat = x_nchw.reshape(N, Cin, HW)    # metadata-only reshape
    b2 = conv_b.reshape(Cout, 1)

    kernel = functools.partial(
        _fused_pool_conv_hswish_kernel, W=W, use_mxu=(HW >= 1024))

    y = pl.pallas_call(
        kernel,
        out_shape=jax.ShapeDtypeStruct((N, Cout, HW), jnp.float32),
        grid=(N, n_co),
        in_specs=[
            pl.BlockSpec((None, Cin, HW), lambda n, co: (n, 0, 0)),
            pl.BlockSpec((co_blk, Cin), lambda n, co: (co, 0)),
            pl.BlockSpec((co_blk, 1), lambda n, co: (co, 0)),
        ],
        out_specs=pl.BlockSpec((None, co_blk, HW), lambda n, co: (n, co, 0)),
        compiler_params=pltpu.CompilerParams(
            dimension_semantics=("parallel", "parallel")),
    )(x_flat, conv_w, b2)

    # metadata-only: back to (N, Cout, H, W) then unsqueeze(-1)
    return y.reshape(N, Cout, H, W)[..., None]


# Pure-JAX reference (mirrors the PyTorch module) for a sanity check.
def model_forward_ref(x_nchw, conv_w, conv_b):
    N, C, H, W = x_nchw.shape
    xp = jnp.pad(x_nchw, ((0, 0), (0, 0), (1, 1), (1, 1)))
    acc = jnp.zeros_like(x_nchw)
    for dh in range(3):
        for dw in range(3):
            acc = acc + xp[:, :, dh:dh + H, dw:dw + W]
    t1 = acc / 9.0
    t2 = jnp.einsum("nchw,oc->nohw", t1, conv_w) + conv_b[None, :, None, None]
    t5 = jnp.clip(t2 + 3.0, 0.0, 6.0)
    return (t2 * t5 * (1.0 / 6.0))[..., None]


if __name__ == "__main__":
    key = jax.random.PRNGKey(0)
    k_x, k_w, k_b = jax.random.split(key, 3)

    # Small shapes consistent with the module: Cin=3, Cout=192, spatial=16.
    N, Cin, H, W, Cout = 2, 3, 16, 16, 192
    x = jax.random.normal(k_x, (N, Cin, H, W), dtype=jnp.float32)

    # Deterministic synthetic Conv2d(3, 192, 1) parameters.
    conv_w = jax.random.normal(k_w, (Cout, Cin), dtype=jnp.float32) * 0.1
    conv_b = jax.random.normal(k_b, (Cout,), dtype=jnp.float32) * 0.1

    out = jax.block_until_ready(model_forward(x, conv_w, conv_b))
    ref = model_forward_ref(x, conv_w, conv_b)

    assert out.shape == (N, Cout, H, W, 1), out.shape
    assert jnp.allclose(out, ref, atol=1e-4, rtol=1e-4), "mismatch vs reference"

    print("KERNEL_OK")
</pallas_src>

<mosaic_0001>
module attributes {stable_mosaic.version = 11 : i64} {
  func.func @_fused_pool_conv_hswish_kernel(%arg0: i32, %arg1: i32, %arg2: memref<1x3x256xf32, #tpu.memory_space<vmem>>, %arg3: memref<96x3xf32, #tpu.memory_space<vmem>>, %arg4: memref<96x1xf32, #tpu.memory_space<vmem>>, %arg5: memref<1x96x256xf32, #tpu.memory_space<vmem>>) attributes {dimension_semantics = [#tpu.dimension_semantics<parallel>, #tpu.dimension_semantics<parallel>], iteration_bounds = array<i64: 2, 2>, scalar_prefetch = 0 : i64, scratch_operands = 0 : i64, tpu.core_type = #tpu.core_type<tc>, window_params = [{transform_indices = @transform_0, window_bounds = array<i64: 1, 3, 256>}, {transform_indices = @transform_1, window_bounds = array<i64: 96, 3>}, {transform_indices = @transform_2, window_bounds = array<i64: 96, 1>}, {transform_indices = @transform_3, window_bounds = array<i64: 1, 96, 256>}]} {
    %c0 = arith.constant 0 : index
    %c0_0 = arith.constant 0 : index
    %c0_1 = arith.constant 0 : index
    %0 = vector.load %arg2[%c0, %c0_0, %c0_1] : memref<1x3x256xf32, #tpu.memory_space<vmem>>, vector<1x3x256xf32>
    %1 = vector.shape_cast %0 : vector<1x3x256xf32> to vector<3x256xf32>
    %2 = tpu.iota {dimensions = array<i32: 1>} : vector<1x256xi32>
    %c16_i32 = arith.constant 16 : i32
    %c0_i32 = arith.constant 0 : i32
    %3 = arith.cmpi eq, %c16_i32, %c0_i32 : i32
    %c1_i32 = arith.constant 1 : i32
    %4 = arith.select %3, %c1_i32, %c16_i32 : i32
    %5 = vector.broadcast %4 : i32 to vector<1x256xi32>
    %6 = arith.remsi %2, %5 : vector<1x256xi32>
    %c0_i32_2 = arith.constant 0 : i32
    %7 = vector.broadcast %c0_i32_2 : i32 to vector<1x256xi32>
    %8 = arith.cmpi ne, %6, %7 : vector<1x256xi32>
    %c0_i32_3 = arith.constant 0 : i32
    %9 = vector.broadcast %c0_i32_3 : i32 to vector<1x256xi32>
    %10 = arith.cmpi slt, %6, %9 : vector<1x256xi32>
    %c0_i32_4 = arith.constant 0 : i32
    %11 = arith.cmpi slt, %4, %c0_i32_4 : i32
    %12 = vector.broadcast %11 : i1 to vector<1x256xi1>
    %13 = vector.broadcast %12 : vector<1x256xi1> to vector<1x256xi1>
    %14 = arith.xori %10, %13 : vector<1x256xi1>
    %15 = arith.andi %14, %8 : vector<1x256xi1>
    %16 = vector.broadcast %4 : i32 to vector<1x256xi32>
    %17 = arith.addi %6, %16 : vector<1x256xi32>
    %18 = arith.select %15, %17, %6 : vector<1x256xi1>, vector<1x256xi32>
    %c0_i32_5 = arith.constant 0 : i32
    %19 = vector.broadcast %c0_i32_5 : i32 to vector<1x256xi32>
    %20 = arith.cmpi sgt, %18, %19 : vector<1x256xi32>
    %c15_i32 = arith.constant 15 : i32
    %21 = vector.broadcast %c15_i32 : i32 to vector<1x256xi32>
    %22 = arith.cmpi slt, %18, %21 : vector<1x256xi32>
    %c16_i32_6 = arith.constant 16 : i32
    %23 = vector.broadcast %c16_i32_6 : i32 to vector<1x256xi32>
    %24 = arith.cmpi sge, %2, %23 : vector<1x256xi32>
    %c240_i32 = arith.constant 240 : i32
    %25 = vector.broadcast %c240_i32 : i32 to vector<1x256xi32>
    %26 = arith.cmpi slt, %2, %25 : vector<1x256xi32>
    %c1_i32_7 = arith.constant 1 : i32
    %27 = tpu.dynamic_rotate %1 by %c1_i32_7 dim 1 : vector<3x256xf32>, i32 -> vector<3x256xf32>
    %cst = arith.constant 0.000000e+00 : f32
    %28 = vector.shape_cast %20 : vector<1x256xi1> to vector<1x256xi1>
    %29 = vector.broadcast %28 : vector<1x256xi1> to vector<3x256xi1>
    %30 = vector.broadcast %cst : f32 to vector<3x256xf32>
    %31 = arith.select %29, %27, %30 : vector<3x256xi1>, vector<3x256xf32>
    %c255_i32 = arith.constant 255 : i32
    %32 = tpu.dynamic_rotate %1 by %c255_i32 dim 1 : vector<3x256xf32>, i32 -> vector<3x256xf32>
    %cst_8 = arith.constant 0.000000e+00 : f32
    %33 = vector.shape_cast %22 : vector<1x256xi1> to vector<1x256xi1>
    %34 = vector.broadcast %33 : vector<1x256xi1> to vector<3x256xi1>
    %35 = vector.broadcast %cst_8 : f32 to vector<3x256xf32>
    %36 = arith.select %34, %32, %35 : vector<3x256xi1>, vector<3x256xf32>
    %37 = arith.addf %31, %1 : vector<3x256xf32>
    %38 = arith.addf %37, %36 : vector<3x256xf32>
    %c16_i32_9 = arith.constant 16 : i32
    %39 = tpu.dynamic_rotate %38 by %c16_i32_9 dim 1 : vector<3x256xf32>, i32 -> vector<3x256xf32>
    %cst_10 = arith.constant 0.000000e+00 : f32
    %40 = vector.shape_cast %24 : vector<1x256xi1> to vector<1x256xi1>
    %41 = vector.broadcast %40 : vector<1x256xi1> to vector<3x256xi1>
    %42 = vector.broadcast %cst_10 : f32 to vector<3x256xf32>
    %43 = arith.select %41, %39, %42 : vector<3x256xi1>, vector<3x256xf32>
    %c240_i32_11 = arith.constant 240 : i32
    %44 = tpu.dynamic_rotate %38 by %c240_i32_11 dim 1 : vector<3x256xf32>, i32 -> vector<3x256xf32>
    %cst_12 = arith.constant 0.000000e+00 : f32
    %45 = vector.shape_cast %26 : vector<1x256xi1> to vector<1x256xi1>
    %46 = vector.broadcast %45 : vector<1x256xi1> to vector<3x256xi1>
    %47 = vector.broadcast %cst_12 : f32 to vector<3x256xf32>
    %48 = arith.select %46, %44, %47 : vector<3x256xi1>, vector<3x256xf32>
    %49 = arith.addf %43, %38 : vector<3x256xf32>
    %50 = arith.addf %49, %48 : vector<3x256xf32>
    %cst_13 = arith.constant 0.111111112 : f32
    %51 = vector.broadcast %cst_13 : f32 to vector<3x256xf32>
    %52 = arith.mulf %50, %51 : vector<3x256xf32>
    %c0_14 = arith.constant 0 : index
    %c0_15 = arith.constant 0 : index
    %53 = vector.load %arg3[%c0_14, %c0_15] : memref<96x3xf32, #tpu.memory_space<vmem>>, vector<96x3xf32>
    %c0_16 = arith.constant 0 : index
    %c0_17 = arith.constant 0 : index
    %54 = vector.load %arg4[%c0_16, %c0_17] : memref<96x1xf32, #tpu.memory_space<vmem>>, vector<96x1xf32>
    %55 = vector.extract_strided_slice %53 {offsets = [0, 0], sizes = [96, 1], strides = [1, 1]} : vector<96x3xf32> to vector<96x1xf32>
    %56 = vector.extract_strided_slice %52 {offsets = [0, 0], sizes = [1, 256], strides = [1, 1]} : vector<3x256xf32> to vector<1x256xf32>
    %57 = vector.broadcast %55 : vector<96x1xf32> to vector<96x256xf32>
    %58 = vector.broadcast %56 : vector<1x256xf32> to vector<96x256xf32>
    %59 = arith.mulf %57, %58 : vector<96x256xf32>
    %60 = vector.broadcast %54 : vector<96x1xf32> to vector<96x256xf32>
    %61 = arith.addf %60, %59 : vector<96x256xf32>
    %62 = vector.extract_strided_slice %53 {offsets = [0, 1], sizes = [96, 1], strides = [1, 1]} : vector<96x3xf32> to vector<96x1xf32>
    %63 = vector.extract_strided_slice %52 {offsets = [1, 0], sizes = [1, 256], strides = [1, 1]} : vector<3x256xf32> to vector<1x256xf32>
    %64 = vector.broadcast %62 : vector<96x1xf32> to vector<96x256xf32>
    %65 = vector.broadcast %63 : vector<1x256xf32> to vector<96x256xf32>
    %66 = arith.mulf %64, %65 : vector<96x256xf32>
    %67 = arith.addf %61, %66 : vector<96x256xf32>
    %68 = vector.extract_strided_slice %53 {offsets = [0, 2], sizes = [96, 1], strides = [1, 1]} : vector<96x3xf32> to vector<96x1xf32>
    %69 = vector.extract_strided_slice %52 {offsets = [2, 0], sizes = [1, 256], strides = [1, 1]} : vector<3x256xf32> to vector<1x256xf32>
    %70 = vector.broadcast %68 : vector<96x1xf32> to vector<96x256xf32>
    %71 = vector.broadcast %69 : vector<1x256xf32> to vector<96x256xf32>
    %72 = arith.mulf %70, %71 : vector<96x256xf32>
    %73 = arith.addf %67, %72 : vector<96x256xf32>
    %cst_18 = arith.constant 3.000000e+00 : f32
    %74 = vector.broadcast %cst_18 : f32 to vector<96x256xf32>
    %75 = arith.addf %73, %74 : vector<96x256xf32>
    %cst_19 = arith.constant 0.000000e+00 : f32
    %cst_20 = arith.constant 6.000000e+00 : f32
    %76 = vector.broadcast %cst_19 : f32 to vector<96x256xf32>
    %77 = arith.maximumf %76, %75 : vector<96x256xf32>
    %78 = vector.broadcast %cst_20 : f32 to vector<96x256xf32>
    %79 = arith.minimumf %78, %77 : vector<96x256xf32>
    %80 = arith.mulf %73, %79 : vector<96x256xf32>
    %cst_21 = arith.constant 0.166666672 : f32
    %81 = vector.broadcast %cst_21 : f32 to vector<96x256xf32>
    %82 = arith.mulf %80, %81 : vector<96x256xf32>
    %c0_22 = arith.constant 0 : index
    %c0_23 = arith.constant 0 : index
    %c0_24 = arith.constant 0 : index
    %83 = vector.load %arg5[%c0_22, %c0_23, %c0_24] : memref<1x96x256xf32, #tpu.memory_space<vmem>>, vector<1x96x256xf32>
    %84 = vector.shape_cast %83 : vector<1x96x256xf32> to vector<96x256xf32>
    %85 = vector.shape_cast %82 : vector<96x256xf32> to vector<1x96x256xf32>
    tpu.vector_store %arg5[%c0_22, %c0_23, %c0_24], %85 {strides = array<i32>} : memref<1x96x256xf32, #tpu.memory_space<vmem>>, vector<1x96x256xf32>,
    return
  }
  func.func @transform_0(%arg0: i32, %arg1: i32) -> (i32, i32, i32) {
    %c0_i32 = arith.constant 0 : i32
    %c0_i32_0 = arith.constant 0 : i32
    %c0_i32_1 = arith.constant 0 : i32
    return %arg0, %c0_i32, %c0_i32_0 : i32, i32, i32
  }
  func.func @transform_1(%arg0: i32, %arg1: i32) -> (i32, i32) {
    %c0_i32 = arith.constant 0 : i32
    %c0_i32_0 = arith.constant 0 : i32
    return %arg1, %c0_i32 : i32, i32
  }
  func.func @transform_2(%arg0: i32, %arg1: i32) -> (i32, i32) {
    %c0_i32 = arith.constant 0 : i32
    %c0_i32_0 = arith.constant 0 : i32
    return %arg1, %c0_i32 : i32, i32
  }
  func.func @transform_3(%arg0: i32, %arg1: i32) -> (i32, i32, i32) {
    %c0_i32 = arith.constant 0 : i32
    %c0_i32_0 = arith.constant 0 : i32
    return %arg0, %arg1, %c0_i32 : i32, i32, i32
  }
}

</mosaic_0001>

<llo_original>
// kernel: model_forward.1
$region0: #{model_forward.1}
  #allocation0 [shape = 'u32[]', space=smem, size = 0x4, offset = 0x4, fixed_abs, tag = 'smem constant byte address 0x4 - core index']
  #allocation1 [shape = 'u32[144,128]{1,0:T(1,128)}', space=vmem, size = 0x12000, scoped, tag = 'internal scratch']
  %s0 = inlined_call_operand.vmem [shape: f32[2,3,256], index: 0, kind: input, shape index: {}]
  %s1 = inlined_call_operand.vmem [shape: f32[192,3], index: 1, kind: input, shape index: {}]
  %s2 = inlined_call_operand.vmem [shape: f32[192,1], index: 2, kind: input, shape index: {}]
  %s3 = inlined_call_operand.vmem [shape: f32[2,192,256], index: 3, kind: output, shape index: {}]
  %s4 = sld [smem:[#allocation0]]
  $region45: #{model_forward.1} parent=0
    _
  %s6 = ssub.s32 1, %s4
  %s7 = scalar_select 0, %s6, %s4
  loop: start=0, step=1, limit=6
  $region2: #{model_forward.1} parent=0 // loop_pre_header
    _
  $region3: #{model_forward.1} parent=0 // loop_header
    %s9 = sphi 0, %s13
    %p10 = scmp.ge.s32.totalorder %s9, 6
    %s16 = sphi 0, %s28
    %s17 = sphi 0, %s24
    %s18 = sphi 0, %s16
    %s19 = sphi 0, %s17
    %s20 = sphi 0, %s18
    %s21 = sphi 0, %s19
    %s31 = sphi 0, %s33
    %s34 = sphi 0, %s31
    %s35 = sphi 0, %s34
    %s51 = sphi 0, %s35
    %s57 = sphi 0, %s59
    %s60 = sphi 0, %s57
    %s61 = sphi 0, %s60
    %s77 = sphi 0, %s61
    %s83 = sphi 0, %s85
    %s86 = sphi 0, %s83
    %s87 = sphi 0, %s86
    %s103 = sphi 0, %s87
    %s111 = sphi 0, %s113
    %s114 = sphi 0, %s111
    %s115 = sphi 0, %s114
    %s131 = sphi 0, %s115
  $region4: #{model_forward.1} parent=0 // loop_header_branch
    %12 = sbr.rel (%p10) target = $region8
  $region5: #{model_forward.1} parent=0 // loop_body
    %s14 = ssub.s32 %s9, 1
    %s15 = ssub.s32 %s9, 2
    %s22 = sadd.s32 1, %s17
    %p23 = scmp.ge.s32.totalorder %s22, 2
    %s24 = scalar_select %p23, 0, %s22
    %s25 = sadd.s32 1, %s16
    %s26 = scalar_select %p23, %s25, %s16
    %p27 = scmp.ge.s32.totalorder %s26, 2
    %s28 = scalar_select %p27, 0, %s26
    %s29 = ssub.s32 %s16, %s28
    %p30 = scmp.eq.s32.totalorder %s29, 0
    %s32 = sadd.s32 %s31, 1
    %s33 = scalar_select %p30, %s31, %s32
    %p36 = pneg %p30
    %p37 = scmp.eq.s32.totalorder %s9, 3
    %p38 = por %p36, %p37
    %p39 = scmp.ne.s32.totalorder %s31, %s34
    %p40 = scmp.eq.s32.totalorder %s9, 0
    %p41 = por %p39, %p40
    %p42 = scmp.ne.s32.totalorder %s31, %s34
    %p43 = scmp.eq.s32.totalorder %s14, 3
    %p44 = por %p42, %p43
    %p45 = scmp.ne.s32.totalorder %s34, %s35
    %p46 = scmp.eq.s32.totalorder %s14, 0
    %p47 = por %p45, %p46
    %p48 = scmp.ne.s32.totalorder %s34, %s35
    %p49 = scmp.eq.s32.totalorder %s15, 3
    %p50 = por %p48, %p49
    %p52 = scmp.ne.s32.totalorder %s35, %s51
    %p53 = scmp.eq.s32.totalorder %s15, 0
    %p54 = por %p52, %p53
    %s55 = ssub.s32 %s17, %s24
    %p56 = scmp.eq.s32.totalorder %s55, 0
    %s58 = sadd.s32 %s57, 1
    %s59 = scalar_select %p56, %s57, %s58
    %p62 = pneg %p56
    %p63 = scmp.eq.s32.totalorder %s9, 3
    %p64 = por %p62, %p63
    %p65 = scmp.ne.s32.totalorder %s57, %s60
    %p66 = scmp.eq.s32.totalorder %s9, 0
    %p67 = por %p65, %p66
    %p68 = scmp.ne.s32.totalorder %s57, %s60
    %p69 = scmp.eq.s32.totalorder %s14, 3
    %p70 = por %p68, %p69
    %p71 = scmp.ne.s32.totalorder %s60, %s61
    %p72 = scmp.eq.s32.totalorder %s14, 0
    %p73 = por %p71, %p72
    %p74 = scmp.ne.s32.totalorder %s60, %s61
    %p75 = scmp.eq.s32.totalorder %s15, 3
    %p76 = por %p74, %p75
    %p78 = scmp.ne.s32.totalorder %s61, %s77
    %p79 = scmp.eq.s32.totalorder %s15, 0
    %p80 = por %p78, %p79
    %s81 = ssub.s32 %s17, %s24
    %p82 = scmp.eq.s32.totalorder %s81, 0
    %s84 = sadd.s32 %s83, 1
    %s85 = scalar_select %p82, %s83, %s84
    %p88 = pneg %p82
    %p89 = scmp.eq.s32.totalorder %s9, 3
    %p90 = por %p88, %p89
    %p91 = scmp.ne.s32.totalorder %s83, %s86
    %p92 = scmp.eq.s32.totalorder %s9, 0
    %p93 = por %p91, %p92
    %p94 = scmp.ne.s32.totalorder %s83, %s86
    %p95 = scmp.eq.s32.totalorder %s14, 3
    %p96 = por %p94, %p95
    %p97 = scmp.ne.s32.totalorder %s86, %s87
    %p98 = scmp.eq.s32.totalorder %s14, 0
    %p99 = por %p97, %p98
    %p100 = scmp.ne.s32.totalorder %s86, %s87
    %p101 = scmp.eq.s32.totalorder %s15, 3
    %p102 = por %p100, %p101
    %p104 = scmp.ne.s32.totalorder %s87, %s103
    %p105 = scmp.eq.s32.totalorder %s15, 0
    %p106 = por %p104, %p105
    %s107 = ssub.s32 %s16, %s28
    %s108 = ssub.s32 %s17, %s24
    %s109 = sor.u32 %s107, %s108
    %p110 = scmp.eq.s32.totalorder %s109, 0
    %s112 = sadd.s32 %s111, 1
    %s113 = scalar_select %p110, %s111, %s112
    %p116 = pneg %p110
    %p117 = scmp.eq.s32.totalorder %s9, 3
    %p118 = por %p116, %p117
    %p119 = scmp.ne.s32.totalorder %s111, %s114
    %p120 = scmp.eq.s32.totalorder %s9, 0
    %p121 = por %p119, %p120
    %p122 = scmp.ne.s32.totalorder %s111, %s114
    %p123 = scmp.eq.s32.totalorder %s14, 3
    %p124 = por %p122, %p123
    %p125 = scmp.ne.s32.totalorder %s114, %s115
    %p126 = scmp.eq.s32.totalorder %s14, 0
    %p127 = por %p125, %p126
    %p128 = scmp.ne.s32.totalorder %s114, %s115
    %p129 = scmp.eq.s32.totalorder %s15, 3
    %p130 = por %p128, %p129
    %p132 = scmp.ne.s32.totalorder %s115, %s131
    %p133 = scmp.eq.s32.totalorder %s15, 0
    %p134 = por %p132, %p133
    %p135 = scmp.le.s32.totalorder 1, %s9
    %p136 = scmp.lt.s32.totalorder %s9, 5
    %p137 = pnand %p135, %p136
    %p138 = pneg %p137
    // Predicated region
    $region9: #{model_forward.1} parent=5 // pred_check
      _
    $region10: #{model_forward.1} parent=5 // pred_check_branch
      %140 = sbr.rel (%p137) target = $region12
    $region11: #{model_forward.1} parent=5 // pred_region
      %s141 = ssub.s32 %s9, 1
    $region12: #{model_forward.1} parent=5 // pred_fallthru
      _
    %p142 = scmp.lt.s32.totalorder %s9, 4
    // Predicated region
    $region13: #{model_forward.1} parent=5 // pred_check
      %p143 = pneg %p142
    $region14: #{model_forward.1} parent=5 // pred_check_branch
      %145 = sbr.rel (%p143) target = $region16
    $region15: #{model_forward.1} parent=5 // pred_region
      // Predicated region
      $region17: #{model_forward.1} parent=15 // pred_check
        %p146 = pneg %p41
      $region18: #{model_forward.1} parent=15 // pred_check_branch
        %148 = sbr.rel (%p146) target = $region20
      $region19: #{model_forward.1} parent=15 // pred_region
        %p149 = scmp.lt.s32.totalorder %s16, 1
        %s150 = scalar_select %p149, %s16, 1
        %s151 = smul.addr %s150, 2
        %s152 = smul.addr %s151, 4
        %s153 = scalar_lea.vmem %s0, %s152
      $region20: #{model_forward.1} parent=15 // pred_fallthru
        _
      // Predicated region
      $region21: #{model_forward.1} parent=15 // pred_check
        %p154 = pneg %p67
      $region22: #{model_forward.1} parent=15 // pred_check_branch
        %156 = sbr.rel (%p154) target = $region24
      $region23: #{model_forward.1} parent=15 // pred_region
        %s157 = smul.u32 12, %s17
        %p158 = scmp.lt.s32.totalorder %s157, 23
        %s159 = scalar_select %p158, %s157, 23
        %s160 = smul.addr %s159, 8
        %s161 = scalar_lea.vmem %s1, %s160
        %s162 = smul.u32 12, %s17
      $region24: #{model_forward.1} parent=15 // pred_fallthru
        _
      // Predicated region
      $region25: #{model_forward.1} parent=15 // pred_check
        %p163 = pneg %p93
      $region26: #{model_forward.1} parent=15 // pred_check_branch
        %165 = sbr.rel (%p163) target = $region28
      $region27: #{model_forward.1} parent=15 // pred_region
        %s166 = smul.u32 12, %s17
        %p167 = scmp.lt.s32.totalorder %s166, 23
        %s168 = scalar_select %p167, %s166, 23
        %s169 = smul.addr %s168, 8
        %s170 = scalar_lea.vmem %s2, %s169
        %s171 = smul.u32 12, %s17
      $region28: #{model_forward.1} parent=15 // pred_fallthru
        _
    $region16: #{model_forward.1} parent=5 // pred_fallthru
      _
    %p172 = scmp.le.s32.totalorder 1, %s9
    %p173 = scmp.lt.s32.totalorder %s9, 5
    %p174 = pnand %p172, %p173
    %p175 = pneg %p174
    // Predicated region
    $region29: #{model_forward.1} parent=5 // pred_check
      _
    $region30: #{model_forward.1} parent=5 // pred_check_branch
      %177 = sbr.rel (%p174) target = $region32
    $region31: #{model_forward.1} parent=5 // pred_region
      %s178 = ssub.s32 %s9, 1
      %p179 = scmp.lt.s32.totalorder %s18, 1
      %s180 = scalar_select %p179, %s18, 1
      %s181 = smul.addr %s180, 2
      %s182 = smul.addr %s181, 4
      %s183 = scalar_lea.vmem %s0, %s182
      %p184 = pneg %p47
      %p185 = pneg %p44
      %s186 = smul.u32 12, %s19
      %p187 = scmp.lt.s32.totalorder %s186, 23
      %s188 = scalar_select %p187, %s186, 23
      %s189 = smul.addr %s188, 8
      %s190 = scalar_lea.vmem %s1, %s189
      %p191 = pneg %p73
      %p192 = pneg %p70
      %s193 = smul.u32 12, %s19
      %p194 = scmp.lt.s32.totalorder %s193, 23
      %s195 = scalar_select %p194, %s193, 23
      %s196 = smul.addr %s195, 8
      %s197 = scalar_lea.vmem %s2, %s196
      %p198 = pneg %p99
      %p199 = pneg %p96
      %p200 = pneg %p127
      %p201 = pneg %p124
      %s202 = smul.u32 12, %s19
      %p203 = scmp.lt.s32.totalorder %s18, 1
      %s204 = scalar_select %p203, %s18, 1
      %p205 = scmp.lt.s32.totalorder %s202, 23
      %s206 = scalar_select %p205, %s202, 23
      %s207 = smul.addr %s206, 2
      %s208 = smul.addr %s204, 48
      %s209 = sadd.s32 %s207, %s208
      %s210 = smul.addr %s209, 8
      %s211 = scalar_lea.vmem %s3, %s210
      %p212 = scmp.lt.s32.totalorder %s18, 1
      %s213 = scalar_select %p212, %s18, 1
      %s214 = smul.addr %s213, 2
      %s215 = smul.addr %s214, 4
      %s216 = scalar_lea.vmem %s0, %s215
      %s217 = smul.u32 12, %s19
      %p218 = scmp.lt.s32.totalorder %s217, 23
      %s219 = scalar_select %p218, %s217, 23
      %s220 = smul.addr %s219, 8
      %s221 = scalar_lea.vmem %s1, %s220
      %s222 = smul.u32 12, %s19
      %s223 = smul.u32 12, %s19
      %p224 = scmp.lt.s32.totalorder %s223, 23
      %s225 = scalar_select %p224, %s223, 23
      %s226 = smul.addr %s225, 8
      %s227 = scalar_lea.vmem %s2, %s226
      %s228 = smul.u32 12, %s19
      %s229 = smul.u32 12, %s19
      %p230 = scmp.lt.s32.totalorder %s18, 1
      %s231 = scalar_select %p230, %s18, 1
      %p232 = scmp.lt.s32.totalorder %s229, 23
      %s233 = scalar_select %p232, %s229, 23
      %s234 = smul.addr %s233, 2
      %s235 = smul.addr %s231, 48
      %s236 = sadd.s32 %s234, %s235
      %s237 = smul.addr %s236, 8
      %s238 = scalar_lea.vmem %s3, %s237
      %s239 = smul.u32 12, %s19
      %v240 = vld [vmem:[%s216] sm:$0x77]
      %v241 = vlaneseq
      %v242 = vand.u32 %v241, 127
      %v243 = vadd.s32 %v242, 128
      %vm244 = vcmp.lt.s32.totalorder %v242, 0
      %v245 = vsub.s32 0, %v242
      %v246 = vsel %vm244, %v245, %v242
      %v247 = vshrl.u32 %v246, 4
      %v248 = vand.u32 %v246, 15
      %v249 = vsub.s32 0, %v248
      %v250 = vsel %vm244, %v249, %v248
      %vm251 = vcmp.lt.s32.totalorder %v243, 0
      %v252 = vsub.s32 0, %v243
      %v253 = vsel %vm251, %v252, %v243
      %v254 = vshrl.u32 %v253, 4
      %v255 = vand.u32 %v253, 15
      %v256 = vsub.s32 0, %v255
      %v257 = vsel %vm251, %v256, %v255
      %vm258 = vcmp.ne.s32.totalorder %v250, 0
      %vm259 = vcmp.ne.s32.totalorder %v257, 0
      %vm260 = vcmp.lt.s32.totalorder %v250, 0
      %vm261 = vcmp.lt.s32.totalorder %v257, 0
      %vm262 = vmand %vm260, %vm258
      %vm263 = vmand %vm261, %vm259
      %v264 = vadd.s32 %v250, 16
      %v265 = vadd.s32 %v257, 16
      %v266 = vsel %vm262, %v264, %v250
      %v267 = vsel %vm263, %v265, %v257
      %vm268 = vcmp.gt.s32.totalorder %v266, 0
      %vm269 = vcmp.gt.s32.totalorder %v267, 0
      %vm270 = vcmp.lt.s32.totalorder %v266, 15
      %vm271 = vcmp.lt.s32.totalorder %v267, 15
      %vm272 = vcmp.ge.s32.totalorder %v242, 16
      %vm273 = vcmp.ge.s32.totalorder %v243, 16
      %vm274 = vcmp.lt.s32.totalorder %v242, 240
      %vm275 = vcmp.lt.s32.totalorder %v243, 240
      %v277 = vcombine.high %v240, %v240
      %279 = vrot.lane.b32.xlu0 %v240, 1
      %v280 = vpop.permute.xlu0 %279
      %281 = vrot.lane.b32.xlu0 %v277, 1
      %v282 = vpop.permute.xlu0 %281
      %vm283 = vcmp.lt.s32.totalorder %v242, 1
      %v284 = vsel %vm283, %v280, %v282
      %v285 = vsel %vm283, %v282, %v280
      %v286 = vsel %vm268, 1, 0
      %v287 = vsel %vm269, 1, 0
      %vm288 = vcmp.eq.s32.totalorder %v286, 1
      %vm289 = vcmp.eq.s32.totalorder %v287, 1
      %v290 = vsel %vm288, %v285, 0.0
      %v291 = vsel %vm289, %v284, 0.0
      %292 = vrot.lane.b32.xlu0 %v240, 127
      %v293 = vpop.permute.xlu0 %292
      %294 = vrot.lane.b32.xlu0 %v277, 127
      %v295 = vpop.permute.xlu0 %294
      %vm296 = vcmp.lt.s32.totalorder %v242, 127
      %v297 = vsel %vm296, %v293, %v295
      %v298 = vsel %vm296, %v295, %v293
      %v299 = vsel %vm270, 1, 0
      %v300 = vsel %vm271, 1, 0
      %vm301 = vcmp.eq.s32.totalorder %v299, 1
      %vm302 = vcmp.eq.s32.totalorder %v300, 1
      %v303 = vsel %vm301, %v297, 0.0
      %v304 = vsel %vm302, %v298, 0.0
      %v305 = vadd.f32 %v290, %v240
      %v306 = vadd.f32 %v291, %v277
      %v307 = vadd.f32 %v305, %v303
      %v308 = vadd.f32 %v306, %v304
      %309 = vrot.lane.b32.xlu0 %v307, 16
      %v310 = vpop.permute.xlu0 %309
      %311 = vrot.lane.b32.xlu0 %v308, 16
      %v312 = vpop.permute.xlu0 %311
      %vm313 = vcmp.lt.s32.totalorder %v242, 16
      %v314 = vsel %vm313, %v310, %v312
      %v315 = vsel %vm313, %v312, %v310
      %v316 = vsel %vm272, 1, 0
      %v317 = vsel %vm273, 1, 0
      %vm318 = vcmp.eq.s32.totalorder %v316, 1
      %vm319 = vcmp.eq.s32.totalorder %v317, 1
      %v320 = vsel %vm318, %v315, 0.0
      %v321 = vsel %vm319, %v314, 0.0
      %322 = vrot.lane.b32.xlu0 %v307, 112
      %v323 = vpop.permute.xlu0 %322
      %324 = vrot.lane.b32.xlu0 %v308, 112
      %v325 = vpop.permute.xlu0 %324
      %vm326 = vcmp.lt.s32.totalorder %v242, 112
      %v327 = vsel %vm326, %v323, %v325
      %v328 = vsel %vm326, %v325, %v323
      %v329 = vsel %vm274, 1, 0
      %v330 = vsel %vm275, 1, 0
      %vm331 = vcmp.eq.s32.totalorder %v329, 1
      %vm332 = vcmp.eq.s32.totalorder %v330, 1
      %v333 = vsel %vm331, %v327, 0.0
      %v334 = vsel %vm332, %v328, 0.0
      %v335 = vadd.f32 %v320, %v307
      %v336 = vadd.f32 %v321, %v308
      %v337 = vadd.f32 %v335, %v333
      %v338 = vadd.f32 %v336, %v334
      %v339 = vmul.f32 %v337, 0.11111111
      %v340 = vmul.f32 %v338, 0.11111111
      %v341 = vld [vmem:[%s221] sm:$0xff]
      %v342 = vld [vmem:[%s221 + $0x8] sm:$0xff]
      %v343 = vld [vmem:[%s221 + $0x10] sm:$0xff]
      %v344 = vld [vmem:[%s221 + $0x18] sm:$0xff]
      %v345 = vld [vmem:[%s221 + $0x20] sm:$0xff]
      %v346 = vld [vmem:[%s221 + $0x28] sm:$0xff]
      %v347 = vld [vmem:[%s221 + $0x30] sm:$0xff]
      %v348 = vld [vmem:[%s221 + $0x38] sm:$0xff]
      %v349 = vld [vmem:[%s221 + $0x40] sm:$0xff]
      %v350 = vld [vmem:[%s221 + $0x48] sm:$0xff]
      %v351 = vld [vmem:[%s221 + $0x50] sm:$0xff]
      %v352 = vld [vmem:[%s221 + $0x58] sm:$0xff]
      %v353 = vld [vmem:[%s227] sm:$0xff]
      %v354 = vld [vmem:[%s227 + $0x8] sm:$0xff]
      %v355 = vld [vmem:[%s227 + $0x10] sm:$0xff]
      %v356 = vld [vmem:[%s227 + $0x18] sm:$0xff]
      %v357 = vld [vmem:[%s227 + $0x20] sm:$0xff]
      %v358 = vld [vmem:[%s227 + $0x28] sm:$0xff]
      %v359 = vld [vmem:[%s227 + $0x30] sm:$0xff]
      %v360 = vld [vmem:[%s227 + $0x38] sm:$0xff]
      %v361 = vld [vmem:[%s227 + $0x40] sm:$0xff]
      %v362 = vld [vmem:[%s227 + $0x48] sm:$0xff]
      %v363 = vld [vmem:[%s227 + $0x50] sm:$0xff]
      %v364 = vld [vmem:[%s227 + $0x58] sm:$0xff]
      %366 = vset.pattern.permute.xlu0 0
      %367 = vperm.xlu0 %366, %v341
      %v368 = vpop.permute.xlu0 %367
      %371 = vset.pattern.permute.xlu0 0
      %372 = vperm.xlu0 %371, %v342
      %v373 = vpop.permute.xlu0 %372
      %376 = vset.pattern.permute.xlu0 0
      %377 = vperm.xlu0 %376, %v343
      %v378 = vpop.permute.xlu0 %377
      %381 = vset.pattern.permute.xlu0 0
      %382 = vperm.xlu0 %381, %v344
      %v383 = vpop.permute.xlu0 %382
      %386 = vset.pattern.permute.xlu0 0
      %387 = vperm.xlu0 %386, %v345
      %v388 = vpop.permute.xlu0 %387
      %391 = vset.pattern.permute.xlu0 0
      %392 = vperm.xlu0 %391, %v346
      %v393 = vpop.permute.xlu0 %392
      %396 = vset.pattern.permute.xlu0 0
      %397 = vperm.xlu0 %396, %v347
      %v398 = vpop.permute.xlu0 %397
      %401 = vset.pattern.permute.xlu0 0
      %402 = vperm.xlu0 %401, %v348
      %v403 = vpop.permute.xlu0 %402
      %406 = vset.pattern.permute.xlu0 0
      %407 = vperm.xlu0 %406, %v349
      %v408 = vpop.permute.xlu0 %407
      %411 = vset.pattern.permute.xlu0 0
      %412 = vperm.xlu0 %411, %v350
      %v413 = vpop.permute.xlu0 %412
      %416 = vset.pattern.permute.xlu0 0
      %417 = vperm.xlu0 %416, %v351
      %v418 = vpop.permute.xlu0 %417
      %421 = vset.pattern.permute.xlu0 0
      %422 = vperm.xlu0 %421, %v352
      %v423 = vpop.permute.xlu0 %422
      %v425 = vlaneseq
      %v426 = vshrl.u32 %v425, 7
      %v427 = vsub.s32 0, %v426
      %v428 = vrot.slane %v339, %v427
      %v429 = vlaneseq
      %v430 = vshrl.u32 %v429, 7
      %v431 = vsub.s32 0, %v430
      %v432 = vrot.slane %v340, %v431
      %v433 = vmul.f32 %v368, %v428
      %v434 = vmul.f32 %v368, %v432
      %v435 = vmul.f32 %v373, %v428
      %v436 = vmul.f32 %v373, %v432
      %v437 = vmul.f32 %v378, %v428
      %v438 = vmul.f32 %v378, %v432
      %v439 = vmul.f32 %v383, %v428
      %v440 = vmul.f32 %v383, %v432
      %v441 = vmul.f32 %v388, %v428
      %v442 = vmul.f32 %v388, %v432
      %v443 = vmul.f32 %v393, %v428
      %v444 = vmul.f32 %v393, %v432
      %v445 = vmul.f32 %v398, %v428
      %v446 = vmul.f32 %v398, %v432
      %v447 = vmul.f32 %v403, %v428
      %v448 = vmul.f32 %v403, %v432
      %v449 = vmul.f32 %v408, %v428
      %v450 = vmul.f32 %v408, %v432
      %v451 = vmul.f32 %v413, %v428
      %v452 = vmul.f32 %v413, %v432
      %v453 = vmul.f32 %v418, %v428
      %v454 = vmul.f32 %v418, %v432
      %v455 = vmul.f32 %v423, %v428
      %v456 = vmul.f32 %v423, %v432
      %458 = vset.pattern.permute.xlu0 0
      %459 = vperm.xlu0 %458, %v353
      %v460 = vpop.permute.xlu0 %459
      %463 = vset.pattern.permute.xlu0 0
      %464 = vperm.xlu0 %463, %v354
      %v465 = vpop.permute.xlu0 %464
      %468 = vset.pattern.permute.xlu0 0
      %469 = vperm.xlu0 %468, %v355
      %v470 = vpop.permute.xlu0 %469
      %473 = vset.pattern.permute.xlu0 0
      %474 = vperm.xlu0 %473, %v356
      %v475 = vpop.permute.xlu0 %474
      %478 = vset.pattern.permute.xlu0 0
      %479 = vperm.xlu0 %478, %v357
      %v480 = vpop.permute.xlu0 %479
      %483 = vset.pattern.permute.xlu0 0
      %484 = vperm.xlu0 %483, %v358
      %v485 = vpop.permute.xlu0 %484
      %488 = vset.pattern.permute.xlu0 0
      %489 = vperm.xlu0 %488, %v359
      %v490 = vpop.permute.xlu0 %489
      %493 = vset.pattern.permute.xlu0 0
      %494 = vperm.xlu0 %493, %v360
      %v495 = vpop.permute.xlu0 %494
      %498 = vset.pattern.permute.xlu0 0
      %499 = vperm.xlu0 %498, %v361
      %v500 = vpop.permute.xlu0 %499
      %503 = vset.pattern.permute.xlu0 0
      %504 = vperm.xlu0 %503, %v362
      %v505 = vpop.permute.xlu0 %504
      %508 = vset.pattern.permute.xlu0 0
      %509 = vperm.xlu0 %508, %v363
      %v510 = vpop.permute.xlu0 %509
      %513 = vset.pattern.permute.xlu0 0
      %514 = vperm.xlu0 %513, %v364
      %v515 = vpop.permute.xlu0 %514
      %v517 = vadd.f32 %v460, %v433
      %v518 = vadd.f32 %v460, %v434
      %v519 = vadd.f32 %v465, %v435
      %v520 = vadd.f32 %v465, %v436
      %v521 = vadd.f32 %v470, %v437
      %v522 = vadd.f32 %v470, %v438
      %v523 = vadd.f32 %v475, %v439
      %v524 = vadd.f32 %v475, %v440
      %v525 = vadd.f32 %v480, %v441
      %v526 = vadd.f32 %v480, %v442
      %v527 = vadd.f32 %v485, %v443
      %v528 = vadd.f32 %v485, %v444
      %v529 = vadd.f32 %v490, %v445
      %v530 = vadd.f32 %v490, %v446
      %v531 = vadd.f32 %v495, %v447
      %v532 = vadd.f32 %v495, %v448
      %v533 = vadd.f32 %v500, %v449
      %v534 = vadd.f32 %v500, %v450
      %v535 = vadd.f32 %v505, %v451
      %v536 = vadd.f32 %v505, %v452
      %v537 = vadd.f32 %v510, %v453
      %v538 = vadd.f32 %v510, %v454
      %v539 = vadd.f32 %v515, %v455
      %v540 = vadd.f32 %v515, %v456
      %541 = vset.pattern.permute.xlu0 1
      %542 = vperm.xlu0 %541, %v341
      %v543 = vpop.permute.xlu0 %542
      %545 = vset.pattern.permute.xlu0 1
      %546 = vperm.xlu0 %545, %v342
      %v547 = vpop.permute.xlu0 %546
      %549 = vset.pattern.permute.xlu0 1
      %550 = vperm.xlu0 %549, %v343
      %v551 = vpop.permute.xlu0 %550
      %553 = vset.pattern.permute.xlu0 1
      %554 = vperm.xlu0 %553, %v344
      %v555 = vpop.permute.xlu0 %554
      %557 = vset.pattern.permute.xlu0 1
      %558 = vperm.xlu0 %557, %v345
      %v559 = vpop.permute.xlu0 %558
      %561 = vset.pattern.permute.xlu0 1
      %562 = vperm.xlu0 %561, %v346
      %v563 = vpop.permute.xlu0 %562
      %565 = vset.pattern.permute.xlu0 1
      %566 = vperm.xlu0 %565, %v347
      %v567 = vpop.permute.xlu0 %566
      %569 = vset.pattern.permute.xlu0 1
      %570 = vperm.xlu0 %569, %v348
      %v571 = vpop.permute.xlu0 %570
      %573 = vset.pattern.permute.xlu0 1
      %574 = vperm.xlu0 %573, %v349
      %v575 = vpop.permute.xlu0 %574
      %577 = vset.pattern.permute.xlu0 1
      %578 = vperm.xlu0 %577, %v350
      %v579 = vpop.permute.xlu0 %578
      %581 = vset.pattern.permute.xlu0 1
      %582 = vperm.xlu0 %581, %v351
      %v583 = vpop.permute.xlu0 %582
      %585 = vset.pattern.permute.xlu0 1
      %586 = vperm.xlu0 %585, %v352
      %v587 = vpop.permute.xlu0 %586
      %v589 = vlaneseq
      %v590 = vshrl.u32 %v589, 7
      %v591 = vsub.s32 1, %v590
      %v592 = vrot.slane %v339, %v591
      %v593 = vlaneseq
      %v594 = vshrl.u32 %v593, 7
      %v595 = vsub.s32 1, %v594
      %v596 = vrot.slane %v340, %v595
      %v597 = vmul.f32 %v543, %v592
      %v598 = vmul.f32 %v543, %v596
      %v599 = vmul.f32 %v547, %v592
      %v600 = vmul.f32 %v547, %v596
      %v601 = vmul.f32 %v551, %v592
      %v602 = vmul.f32 %v551, %v596
      %v603 = vmul.f32 %v555, %v592
      %v604 = vmul.f32 %v555, %v596
      %v605 = vmul.f32 %v559, %v592
      %v606 = vmul.f32 %v559, %v596
      %v607 = vmul.f32 %v563, %v592
      %v608 = vmul.f32 %v563, %v596
      %v609 = vmul.f32 %v567, %v592
      %v610 = vmul.f32 %v567, %v596
      %v611 = vmul.f32 %v571, %v592
      %v612 = vmul.f32 %v571, %v596
      %v613 = vmul.f32 %v575, %v592
      %v614 = vmul.f32 %v575, %v596
      %v615 = vmul.f32 %v579, %v592
      %v616 = vmul.f32 %v579, %v596
      %v617 = vmul.f32 %v583, %v592
      %v618 = vmul.f32 %v583, %v596
      %v619 = vmul.f32 %v587, %v592
      %v620 = vmul.f32 %v587, %v596
      %v621 = vadd.f32 %v517, %v597
      %v622 = vadd.f32 %v518, %v598
      %v623 = vadd.f32 %v519, %v599
      %v624 = vadd.f32 %v520, %v600
      %v625 = vadd.f32 %v521, %v601
      %v626 = vadd.f32 %v522, %v602
      %v627 = vadd.f32 %v523, %v603
      %v628 = vadd.f32 %v524, %v604
      %v629 = vadd.f32 %v525, %v605
      %v630 = vadd.f32 %v526, %v606
      %v631 = vadd.f32 %v527, %v607
      %v632 = vadd.f32 %v528, %v608
      %v633 = vadd.f32 %v529, %v609
      %v634 = vadd.f32 %v530, %v610
      %v635 = vadd.f32 %v531, %v611
      %v636 = vadd.f32 %v532, %v612
      %v637 = vadd.f32 %v533, %v613
      %v638 = vadd.f32 %v534, %v614
      %v639 = vadd.f32 %v535, %v615
      %v640 = vadd.f32 %v536, %v616
      %v641 = vadd.f32 %v537, %v617
      %v642 = vadd.f32 %v538, %v618
      %v643 = vadd.f32 %v539, %v619
      %v644 = vadd.f32 %v540, %v620
      %645 = vset.pattern.permute.xlu0 2
      %646 = vperm.xlu0 %645, %v341
      %v647 = vpop.permute.xlu0 %646
      %649 = vset.pattern.permute.xlu0 2
      %650 = vperm.xlu0 %649, %v342
      %v651 = vpop.permute.xlu0 %650
      %653 = vset.pattern.permute.xlu0 2
      %654 = vperm.xlu0 %653, %v343
      %v655 = vpop.permute.xlu0 %654
      %657 = vset.pattern.permute.xlu0 2
      %658 = vperm.xlu0 %657, %v344
      %v659 = vpop.permute.xlu0 %658
      %661 = vset.pattern.permute.xlu0 2
      %662 = vperm.xlu0 %661, %v345
      %v663 = vpop.permute.xlu0 %662
      %665 = vset.pattern.permute.xlu0 2
      %666 = vperm.xlu0 %665, %v346
      %v667 = vpop.permute.xlu0 %666
      %669 = vset.pattern.permute.xlu0 2
      %670 = vperm.xlu0 %669, %v347
      %v671 = vpop.permute.xlu0 %670
      %673 = vset.pattern.permute.xlu0 2
      %674 = vperm.xlu0 %673, %v348
      %v675 = vpop.permute.xlu0 %674
      %677 = vset.pattern.permute.xlu0 2
      %678 = vperm.xlu0 %677, %v349
      %v679 = vpop.permute.xlu0 %678
      %681 = vset.pattern.permute.xlu0 2
      %682 = vperm.xlu0 %681, %v350
      %v683 = vpop.permute.xlu0 %682
      %685 = vset.pattern.permute.xlu0 2
      %686 = vperm.xlu0 %685, %v351
      %v687 = vpop.permute.xlu0 %686
      %689 = vset.pattern.permute.xlu0 2
      %690 = vperm.xlu0 %689, %v352
      %v691 = vpop.permute.xlu0 %690
      %v693 = vlaneseq
      %v694 = vshrl.u32 %v693, 7
      %v695 = vsub.s32 2, %v694
      %v696 = vrot.slane %v339, %v695
      %v697 = vlaneseq
      %v698 = vshrl.u32 %v697, 7
      %v699 = vsub.s32 2, %v698
      %v700 = vrot.slane %v340, %v699
      %v701 = vmul.f32 %v647, %v696
      %v702 = vmul.f32 %v647, %v700
      %v703 = vmul.f32 %v651, %v696
      %v704 = vmul.f32 %v651, %v700
      %v705 = vmul.f32 %v655, %v696
      %v706 = vmul.f32 %v655, %v700
      %v707 = vmul.f32 %v659, %v696
      %v708 = vmul.f32 %v659, %v700
      %v709 = vmul.f32 %v663, %v696
      %v710 = vmul.f32 %v663, %v700
      %v711 = vmul.f32 %v667, %v696
      %v712 = vmul.f32 %v667, %v700
      %v713 = vmul.f32 %v671, %v696
      %v714 = vmul.f32 %v671, %v700
      %v715 = vmul.f32 %v675, %v696
      %v716 = vmul.f32 %v675, %v700
      %v717 = vmul.f32 %v679, %v696
      %v718 = vmul.f32 %v679, %v700
      %v719 = vmul.f32 %v683, %v696
      %v720 = vmul.f32 %v683, %v700
      %v721 = vmul.f32 %v687, %v696
      %v722 = vmul.f32 %v687, %v700
      %v723 = vmul.f32 %v691, %v696
      %v724 = vmul.f32 %v691, %v700
      %v725 = vadd.f32 %v621, %v701
      %v726 = vadd.f32 %v622, %v702
      %v727 = vadd.f32 %v623, %v703
      %v728 = vadd.f32 %v624, %v704
      %v729 = vadd.f32 %v625, %v705
      %v730 = vadd.f32 %v626, %v706
      %v731 = vadd.f32 %v627, %v707
      %v732 = vadd.f32 %v628, %v708
      %v733 = vadd.f32 %v629, %v709
      %v734 = vadd.f32 %v630, %v710
      %v735 = vadd.f32 %v631, %v711
      %v736 = vadd.f32 %v632, %v712
      %v737 = vadd.f32 %v633, %v713
      %v738 = vadd.f32 %v634, %v714
      %v739 = vadd.f32 %v635, %v715
      %v740 = vadd.f32 %v636, %v716
      %v741 = vadd.f32 %v637, %v717
      %v742 = vadd.f32 %v638, %v718
      %v743 = vadd.f32 %v639, %v719
      %v744 = vadd.f32 %v640, %v720
      %v745 = vadd.f32 %v641, %v721
      %v746 = vadd.f32 %v642, %v722
      %v747 = vadd.f32 %v643, %v723
      %v748 = vadd.f32 %v644, %v724
      %v749 = vadd.f32 %v725, 3.0
      %v750 = vadd.f32 %v726, 3.0
      %v751 = vadd.f32 %v727, 3.0
      %v752 = vadd.f32 %v728, 3.0
      %v753 = vadd.f32 %v729, 3.0
      %v754 = vadd.f32 %v730, 3.0
      %v755 = vadd.f32 %v731, 3.0
      %v756 = vadd.f32 %v732, 3.0
      %v757 = vadd.f32 %v733, 3.0
      %v758 = vadd.f32 %v734, 3.0
      %v759 = vadd.f32 %v735, 3.0
      %v760 = vadd.f32 %v736, 3.0
      %v761 = vadd.f32 %v737, 3.0
      %v762 = vadd.f32 %v738, 3.0
      %v763 = vadd.f32 %v739, 3.0
      %v764 = vadd.f32 %v740, 3.0
      %v765 = vadd.f32 %v741, 3.0
      %v766 = vadd.f32 %v742, 3.0
      %v767 = vadd.f32 %v743, 3.0
      %v768 = vadd.f32 %v744, 3.0
      %v769 = vadd.f32 %v745, 3.0
      %v770 = vadd.f32 %v746, 3.0
      %v771 = vadd.f32 %v747, 3.0
      %v772 = vadd.f32 %v748, 3.0
      %v773 = vmax.f32 %v749, 0.0
      %v774 = vmax.f32 %v750, 0.0
      %v775 = vmax.f32 %v751, 0.0
      %v776 = vmax.f32 %v752, 0.0
      %v777 = vmax.f32 %v753, 0.0
      %v778 = vmax.f32 %v754, 0.0
      %v779 = vmax.f32 %v755, 0.0
      %v780 = vmax.f32 %v756, 0.0
      %v781 = vmax.f32 %v757, 0.0
      %v782 = vmax.f32 %v758, 0.0
      %v783 = vmax.f32 %v759, 0.0
      %v784 = vmax.f32 %v760, 0.0
      %v785 = vmax.f32 %v761, 0.0
      %v786 = vmax.f32 %v762, 0.0
      %v787 = vmax.f32 %v763, 0.0
      %v788 = vmax.f32 %v764, 0.0
      %v789 = vmax.f32 %v765, 0.0
      %v790 = vmax.f32 %v766, 0.0
      %v791 = vmax.f32 %v767, 0.0
      %v792 = vmax.f32 %v768, 0.0
      %v793 = vmax.f32 %v769, 0.0
      %v794 = vmax.f32 %v770, 0.0
      %v795 = vmax.f32 %v771, 0.0
      %v796 = vmax.f32 %v772, 0.0
      %v797 = vmin.f32 %v773, 6.0
      %v798 = vmin.f32 %v774, 6.0
      %v799 = vmin.f32 %v775, 6.0
      %v800 = vmin.f32 %v776, 6.0
      %v801 = vmin.f32 %v777, 6.0
      %v802 = vmin.f32 %v778, 6.0
      %v803 = vmin.f32 %v779, 6.0
      %v804 = vmin.f32 %v780, 6.0
      %v805 = vmin.f32 %v781, 6.0
      %v806 = vmin.f32 %v782, 6.0
      %v807 = vmin.f32 %v783, 6.0
      %v808 = vmin.f32 %v784, 6.0
      %v809 = vmin.f32 %v785, 6.0
      %v810 = vmin.f32 %v786, 6.0
      %v811 = vmin.f32 %v787, 6.0
      %v812 = vmin.f32 %v788, 6.0
      %v813 = vmin.f32 %v789, 6.0
      %v814 = vmin.f32 %v790, 6.0
      %v815 = vmin.f32 %v791, 6.0
      %v816 = vmin.f32 %v792, 6.0
      %v817 = vmin.f32 %v793, 6.0
      %v818 = vmin.f32 %v794, 6.0
      %v819 = vmin.f32 %v795, 6.0
      %v820 = vmin.f32 %v796, 6.0
      %v821 = vmul.f32 %v725, %v797
      %v822 = vmul.f32 %v726, %v798
      %v823 = vmul.f32 %v727, %v799
      %v824 = vmul.f32 %v728, %v800
      %v825 = vmul.f32 %v729, %v801
      %v826 = vmul.f32 %v730, %v802
      %v827 = vmul.f32 %v731, %v803
      %v828 = vmul.f32 %v732, %v804
      %v829 = vmul.f32 %v733, %v805
      %v830 = vmul.f32 %v734, %v806
      %v831 = vmul.f32 %v735, %v807
      %v832 = vmul.f32 %v736, %v808
      %v833 = vmul.f32 %v737, %v809
      %v834 = vmul.f32 %v738, %v810
      %v835 = vmul.f32 %v739, %v811
      %v836 = vmul.f32 %v740, %v812
      %v837 = vmul.f32 %v741, %v813
      %v838 = vmul.f32 %v742, %v814
      %v839 = vmul.f32 %v743, %v815
      %v840 = vmul.f32 %v744, %v816
      %v841 = vmul.f32 %v745, %v817
      %v842 = vmul.f32 %v746, %v818
      %v843 = vmul.f32 %v747, %v819
      %v844 = vmul.f32 %v748, %v820
      %v845 = vmul.f32 %v821, 0.16666667
      %v846 = vmul.f32 %v822, 0.16666667
      %v847 = vmul.f32 %v823, 0.16666667
      %v848 = vmul.f32 %v824, 0.16666667
      %v849 = vmul.f32 %v825, 0.16666667
      %v850 = vmul.f32 %v826, 0.16666667
      %v851 = vmul.f32 %v827, 0.16666667
      %v852 = vmul.f32 %v828, 0.16666667
      %v853 = vmul.f32 %v829, 0.16666667
      %v854 = vmul.f32 %v830, 0.16666667
      %v855 = vmul.f32 %v831, 0.16666667
      %v856 = vmul.f32 %v832, 0.16666667
      %v857 = vmul.f32 %v833, 0.16666667
      %v858 = vmul.f32 %v834, 0.16666667
      %v859 = vmul.f32 %v835, 0.16666667
      %v860 = vmul.f32 %v836, 0.16666667
      %v861 = vmul.f32 %v837, 0.16666667
      %v862 = vmul.f32 %v838, 0.16666667
      %v863 = vmul.f32 %v839, 0.16666667
      %v864 = vmul.f32 %v840, 0.16666667
      %v865 = vmul.f32 %v841, 0.16666667
      %v866 = vmul.f32 %v842, 0.16666667
      %v867 = vmul.f32 %v843, 0.16666667
      %v868 = vmul.f32 %v844, 0.16666667
      %869 = vst [vmem:[%s238] sm:$0xff] %v845
      %870 = vst [vmem:[%s238 + $0x8] sm:$0xff] %v846
      %871 = vst [vmem:[%s238 + $0x10] sm:$0xff] %v847
      %872 = vst [vmem:[%s238 + $0x18] sm:$0xff] %v848
      %873 = vst [vmem:[%s238 + $0x20] sm:$0xff] %v849
      %874 = vst [vmem:[%s238 + $0x28] sm:$0xff] %v850
      %875 = vst [vmem:[%s238 + $0x30] sm:$0xff] %v851
      %876 = vst [vmem:[%s238 + $0x38] sm:$0xff] %v852
      %877 = vst [vmem:[%s238 + $0x40] sm:$0xff] %v853
      %878 = vst [vmem:[%s238 + $0x48] sm:$0xff] %v854
      %879 = vst [vmem:[%s238 + $0x50] sm:$0xff] %v855
      %880 = vst [vmem:[%s238 + $0x58] sm:$0xff] %v856
      %881 = vst [vmem:[%s238 + $0x60] sm:$0xff] %v857
      %882 = vst [vmem:[%s238 + $0x68] sm:$0xff] %v858
      %883 = vst [vmem:[%s238 + $0x70] sm:$0xff] %v859
      %884 = vst [vmem:[%s238 + $0x78] sm:$0xff] %v860
      %885 = vst [vmem:[%s238 + $0x80] sm:$0xff] %v861
      %886 = vst [vmem:[%s238 + $0x88] sm:$0xff] %v862
      %887 = vst [vmem:[%s238 + $0x90] sm:$0xff] %v863
      %888 = vst [vmem:[%s238 + $0x98] sm:$0xff] %v864
      %889 = vst [vmem:[%s238 + $0xa0] sm:$0xff] %v865
      %890 = vst [vmem:[%s238 + $0xa8] sm:$0xff] %v866
      %891 = vst [vmem:[%s238 + $0xb0] sm:$0xff] %v867
      %892 = vst [vmem:[%s238 + $0xb8] sm:$0xff] %v868
      %s893 = smul.u32 12, %s19
      %p894 = scmp.lt.s32.totalorder %s18, 1
      %s895 = scalar_select %p894, %s18, 1
      %p896 = scmp.lt.s32.totalorder %s893, 23
      %s897 = scalar_select %p896, %s893, 23
      %s898 = smul.addr %s897, 2
      %s899 = smul.addr %s895, 48
      %s900 = sadd.s32 %s898, %s899
      %s901 = smul.addr %s900, 8
      %s902 = scalar_lea.vmem %s3, %s901
      // Predicated region
      $region33: #{model_forward.1} parent=31 // pred_check
        %p903 = pneg %p124
      $region34: #{model_forward.1} parent=31 // pred_check_branch
        %905 = sbr.rel (%p903) target = $region36
      $region35: #{model_forward.1} parent=31 // pred_region
        %s906 = smul.u32 12, %s19
      $region36: #{model_forward.1} parent=31 // pred_fallthru
        _
    $region32: #{model_forward.1} parent=5 // pred_fallthru
      _
    %p907 = scmp.le.s32.totalorder 2, %s9
    // Predicated region
    $region37: #{model_forward.1} parent=5 // pred_check
      %p908 = pneg %p907
    $region38: #{model_forward.1} parent=5 // pred_check_branch
      %910 = sbr.rel (%p908) target = $region40
    $region39: #{model_forward.1} parent=5 // pred_region
      %s911 = ssub.s32 %s9, 2
      // Predicated region
      $region41: #{model_forward.1} parent=39 // pred_check
        %p912 = pneg %p130
      $region42: #{model_forward.1} parent=39 // pred_check_branch
        %914 = sbr.rel (%p912) target = $region44
      $region43: #{model_forward.1} parent=39 // pred_region
        %s915 = smul.u32 12, %s21
        %p916 = scmp.lt.s32.totalorder %s20, 1
        %s917 = scalar_select %p916, %s20, 1
        %p918 = scmp.lt.s32.totalorder %s915, 23
        %s919 = scalar_select %p918, %s915, 23
        %s920 = smul.addr %s919, 2
        %s921 = smul.addr %s917, 48
        %s922 = sadd.s32 %s920, %s921
        %s923 = smul.addr %s922, 8
        %s924 = scalar_lea.vmem %s3, %s923
      $region44: #{model_forward.1} parent=39 // pred_fallthru
        _
    $region40: #{model_forward.1} parent=5 // pred_fallthru
      _
  $region6: #{model_forward.1} parent=0 // loop_footer
    %s13 = sadd.s32 1, %s9
  $region7: #{model_forward.1} parent=0 // loop_footer_branch
    %8 = sbr.rel target = $region3
  $region8: #{model_forward.1} parent=0 // loop_exit
    _

</llo_original>
